<compile_context>
chip_gen: v7x
topology: tpu7x:2x2x1
jax: 0.10.0
libtpu: 0.0.40
codegen_flags: <defaults>
</compile_context>

<pallas_src>
import jax
import jax.numpy as jnp
from jax.experimental import pallas as pl
from jax.experimental.pallas import tpu as pltpu


# Fused sublane-dense slab layout: 11 channels x 8 sublane rows = 88 rows.
#   rows  0:24  means   (x, y, z)
#   rows 24:56  quats   (w, x, y, z)
#   rows 56:80  scales  (x, y, z)
#   rows 80:88  opacity
_SLAB_ROWS = 88


# ----------------------------------------------------------------------------
# Pallas kernel: per-gaussian hot path on one fused (88, T) block
# ----------------------------------------------------------------------------
def _rigged_preprocess_kernel(rot_ref, trans_ref, rotq_ref, slab_ref, out_ref):
    # eps guards the rsqrt on the zero-padded tail (reference has no eps;
    # difference is far below f32 tolerance).
    eps = 1e-12

    # ---- means: SE3 point transform (rigged translation == 0 in this config) --
    m0 = slab_ref[0:8, :]
    m1 = slab_ref[8:16, :]
    m2 = slab_ref[16:24, :]
    out_ref[0:8, :] = (rot_ref[0] * m0 + rot_ref[1] * m1
                       + rot_ref[2] * m2 + trans_ref[0])
    out_ref[8:16, :] = (rot_ref[3] * m0 + rot_ref[4] * m1
                        + rot_ref[5] * m2 + trans_ref[1])
    out_ref[16:24, :] = (rot_ref[6] * m0 + rot_ref[7] * m1
                         + rot_ref[8] * m2 + trans_ref[2])

    # ---- quats: normalize -> (identity rigged rotation folded out) -> SE3 rot -
    qw = slab_ref[24:32, :]
    qx = slab_ref[32:40, :]
    qy = slab_ref[40:48, :]
    qz = slab_ref[48:56, :]
    inv_n = jax.lax.rsqrt(qw * qw + qx * qx + qy * qy + qz * qz + eps)
    qw = qw * inv_n
    qx = qx * inv_n
    qy = qy * inv_n
    qz = qz * inv_n
    # left-multiply by the SE3 rotation quaternion (wxyz, scalars from SMEM)
    sw, sx, sy, sz = rotq_ref[0], rotq_ref[1], rotq_ref[2], rotq_ref[3]
    out_ref[24:32, :] = sw * qw - sx * qx - sy * qy - sz * qz
    out_ref[32:40, :] = sw * qx + sx * qw + sy * qz - sz * qy
    out_ref[40:48, :] = sw * qy - sx * qz + sy * qw + sz * qx
    out_ref[48:56, :] = sw * qz + sx * qy - sy * qx + sz * qw

    # ---- activations ----------------------------------------------------------
    out_ref[56:80, :] = jnp.exp(slab_ref[56:80, :])
    out_ref[80:88, :] = jax.nn.sigmoid(slab_ref[80:88, :])


# ----------------------------------------------------------------------------
# Glue (plain JAX)
# ----------------------------------------------------------------------------
def _rotmat_to_quat(R):
    """3x3 rotation matrix -> wxyz quaternion (branchless, sign-copied)."""
    w = jnp.sqrt(jnp.maximum(0.0, 1.0 + R[0, 0] + R[1, 1] + R[2, 2])) * 0.5
    x = jnp.sqrt(jnp.maximum(0.0, 1.0 + R[0, 0] - R[1, 1] - R[2, 2])) * 0.5
    y = jnp.sqrt(jnp.maximum(0.0, 1.0 - R[0, 0] + R[1, 1] - R[2, 2])) * 0.5
    z = jnp.sqrt(jnp.maximum(0.0, 1.0 - R[0, 0] - R[1, 1] + R[2, 2])) * 0.5
    x = jnp.where(R[2, 1] - R[1, 2] < 0, -x, x)
    y = jnp.where(R[0, 2] - R[2, 0] < 0, -y, y)
    z = jnp.where(R[1, 0] - R[0, 1] < 0, -z, z)
    return jnp.stack([w, x, y, z]).astype(jnp.float32)


def _layout(n, tile_lane):
    """Lane-tile sizing. Returns (tile_lane, lanes_pad, grid_steps)."""
    lanes = -(-n // 8)                            # lane columns after packing
    lanes = max(128, -(-lanes // 128) * 128)      # round up to a multiple of 128
    tile = max(128, (min(tile_lane, lanes) // 128) * 128)
    # v7x has 2 TensorCores; the "parallel" grid axis is sharded across them, so
    # give it at least 2 steps whenever there is enough work to split.
    if lanes >= 256:
        half = -(-(lanes // 2) // 128) * 128
        tile = min(tile, half)
    lanes_pad = -(-lanes // tile) * tile
    return tile, lanes_pad, lanes_pad // tile


def pack_splats(splats, *, tile_lane=8192):
    """One-time packing; call ONCE per scene, outside the per-frame hot path.

    Returns (slab, colors, meta):
      slab   (88, lanes_pad) f32 sublane-dense fused layout (see _SLAB_ROWS map)
      colors (N, K, 3)       pre-concatenated SH coefficients (static per scene)
      meta   dict(n, tile_lane, lanes_pad, grid)
    """
    means = splats['means'].astype(jnp.float32)
    quats = splats['quats'].astype(jnp.float32)
    scales = splats['scales'].astype(jnp.float32)
    opac = splats['opacities'].astype(jnp.float32).reshape(-1, 1)
    n = means.shape[0]
    tile, lanes_pad, grid = _layout(n, tile_lane)
    n_pad = 8 * lanes_pad

    x = jnp.concatenate([means, quats, scales, opac], axis=1)       # (N, 11)
    x = jnp.pad(x, ((0, n_pad - n), (0, 0)))                        # tail padding
    slab = x.T.reshape(_SLAB_ROWS, lanes_pad)                       # one fused transpose

    # Static SH concat done once here (not per frame): colors = cat([sh0, shN], 1)
    colors = jnp.concatenate([splats['sh0'], splats['shN']], axis=1)
    meta = dict(n=n, tile_lane=tile, lanes_pad=lanes_pad, grid=grid)
    return slab, colors, meta


def rigged_preprocess_packed(slab, rotation, translation, meta):
    """Per-frame hot path: only R / t change per call; splats stay packed in HBM."""
    tile = meta['tile_lane']
    lanes_pad = meta['lanes_pad']
    grid = (meta['grid'],)

    rot_flat = rotation.reshape(9).astype(jnp.float32)
    trans = translation.astype(jnp.float32)
    rotq = _rotmat_to_quat(rotation)

    smem = pl.BlockSpec(memory_space=pltpu.MemorySpace.SMEM)
    vspec = pl.BlockSpec((_SLAB_ROWS, tile), lambda i: (0, i))

    # in + out slab per step, double-buffered; cap under v7x's 64 MiB physical.
    bytes_per_step = 2 * _SLAB_ROWS * tile * 4
    vmem_limit = int(min(max(32 << 20, 2 * 2 * bytes_per_step), 48 << 20))

    n_pad = 8 * lanes_pad
    cost = pl.CostEstimate(
        flops=64 * n_pad,
        transcendentals=5 * n_pad,
        bytes_accessed=2 * _SLAB_ROWS * lanes_pad * 4,
    )

    return pl.pallas_call(
        _rigged_preprocess_kernel,
        out_shape=jax.ShapeDtypeStruct((_SLAB_ROWS, lanes_pad), jnp.float32),
        grid=grid,
        in_specs=[smem, smem, smem, vspec],
        out_specs=vspec,
        compiler_params=pltpu.CompilerParams(
            dimension_semantics=("parallel",),
            vmem_limit_bytes=vmem_limit),
        cost_estimate=cost,
    )(rot_flat, trans, rotq, slab)


def unpack_outputs(out_slab, n):
    """Optional glue: (88, lanes_pad) packed output -> (N,3),(N,4),(N,3),(N,)."""
    lanes_pad = out_slab.shape[1]

    def unpack(rows, c):
        return rows.reshape(c, lanes_pad * 8).T[:n, :]

    means = unpack(out_slab[0:24], 3)
    quats = unpack(out_slab[24:56], 4)
    scales = unpack(out_slab[56:80], 3)
    opac = unpack(out_slab[80:88], 1).reshape(-1)
    return means, quats, scales, opac


def rigged_preprocess(splats, rotation, translation, *, tile_lane=8192):
    """Drop-in forward (minimal config). Packs/unpacks every call — prefer
    pack_splats() once per scene + rigged_preprocess_packed() per frame."""
    slab, colors, meta = pack_splats(splats, tile_lane=tile_lane)
    out_slab = rigged_preprocess_packed(slab, rotation, translation, meta)
    means, quats, scales, opac = unpack_outputs(out_slab, meta['n'])
    return means, quats, scales, opac, colors, {}


# ----------------------------------------------------------------------------
# Pure-JAX reference (for a sanity check)
# ----------------------------------------------------------------------------
def _qmul(p, q):
    pw, px, py, pz = p[..., 0], p[..., 1], p[..., 2], p[..., 3]
    qw, qx, qy, qz = q[..., 0], q[..., 1], q[..., 2], q[..., 3]
    return jnp.stack([
        pw * qw - px * qx - py * qy - pz * qz,
        pw * qx + px * qw + py * qz - pz * qy,
        pw * qy - px * qz + py * qw + pz * qx,
        pw * qz + px * qy - py * qx + pz * qw,
    ], axis=-1)


def _reference(splats, R, t):
    q = splats['quats']
    q = q / jnp.linalg.norm(q, axis=-1, keepdims=True)
    gq = jnp.tile(jnp.array([[1.0, 0.0, 0.0, 0.0]], jnp.float32), (q.shape[0], 1))
    q = _qmul(gq, q)
    q = q / jnp.linalg.norm(q, axis=-1, keepdims=True)
    q = _qmul(_rotmat_to_quat(R)[None, :], q)
    m = splats['means'] @ R.T + t[None, :]
    return m, q, jnp.exp(splats['scales']), jax.nn.sigmoid(splats['opacities'])


# ----------------------------------------------------------------------------
if __name__ == "__main__":
    key = jax.random.PRNGKey(0)
    N = 4000          # not a tile multiple -> exercises tail padding + 2-step grid
    K = 16            # SH coefficients for sh_degree=3: sh0 has 1, shN has 15
    F = 32            # feature_dim (unused in the minimal config)
    ks = jax.random.split(key, 7)
    splats = {
        'means':     jax.random.normal(ks[0], (N, 3), jnp.float32),
        'quats':     jax.random.normal(ks[1], (N, 4), jnp.float32),
        'scales':    0.1 * jax.random.normal(ks[2], (N, 3), jnp.float32) - 3.0,
        'opacities': jax.random.normal(ks[3], (N,), jnp.float32),
        'features':  jax.random.normal(ks[4], (N, F), jnp.float32),
        'sh0':       jax.random.normal(ks[5], (N, 1, 3), jnp.float32),
        'shN':       jax.random.normal(ks[6], (N, K - 1, 3), jnp.float32),
    }

    # deterministic SE3 transform: rotation about a fixed axis + translation
    angle = jnp.float32(0.3)
    axis = jnp.array([0.3, 0.5, 0.8], jnp.float32)
    axis = axis / jnp.linalg.norm(axis)
    Kx = jnp.array([[0.0, -axis[2], axis[1]],
                    [axis[2], 0.0, -axis[0]],
                    [-axis[1], axis[0], 0.0]], jnp.float32)
    R = jnp.eye(3, dtype=jnp.float32) + jnp.sin(angle) * Kx \
        + (1.0 - jnp.cos(angle)) * (Kx @ Kx)
    t = jnp.array([0.1, -0.2, 0.3], jnp.float32)

    # one-time packing (per scene), then the per-frame hot path
    slab, colors_o, meta = pack_splats(splats)
    slab = jax.block_until_ready(slab)

    out_slab = rigged_preprocess_packed(slab, R, t, meta)
    out_slab = jax.block_until_ready(out_slab)

    means_o, quats_o, scales_o, opac_o = unpack_outputs(out_slab, N)
    means_o, quats_o, scales_o, opac_o = jax.block_until_ready(
        (means_o, quats_o, scales_o, opac_o))

    # sanity check against the pure-JAX reference
    m_ref, q_ref, s_ref, o_ref = _reference(splats, R, t)
    assert means_o.shape == (N, 3) and quats_o.shape == (N, 4)
    assert scales_o.shape == (N, 3) and opac_o.shape == (N,)
    assert jnp.allclose(means_o, m_ref, rtol=1e-3, atol=1e-3)
    assert jnp.allclose(quats_o, q_ref, rtol=1e-3, atol=1e-3)
    assert jnp.allclose(scales_o, s_ref, rtol=1e-3, atol=1e-3)
    assert jnp.allclose(opac_o, o_ref, rtol=1e-3, atol=1e-3)
    assert colors_o.shape == (N, K, 3)

    # the drop-in convenience wrapper must agree too
    m2, q2, s2, o2, c2, _ = rigged_preprocess(splats, R, t)
    m2 = jax.block_until_ready(m2)
    assert jnp.allclose(m2, m_ref, rtol=1e-3, atol=1e-3)
    assert c2.shape == (N, K, 3)

    print("KERNEL_OK")
</pallas_src>

<mosaic_0001>
module attributes {stable_mosaic.version = 11 : i64} {
  func.func @_rigged_preprocess_kernel(%arg0: i32, %arg1: memref<9xf32, #tpu.memory_space<smem>>, %arg2: memref<3xf32, #tpu.memory_space<smem>>, %arg3: memref<4xf32, #tpu.memory_space<smem>>, %arg4: memref<88x256xf32, #tpu.memory_space<vmem>>, %arg5: memref<88x256xf32, #tpu.memory_space<vmem>>) attributes {dimension_semantics = [#tpu.dimension_semantics<parallel>], iteration_bounds = array<i64: 2>, scalar_prefetch = 0 : i64, scratch_operands = 0 : i64, tpu.core_type = #tpu.core_type<tc>, window_params = [{transform_indices = @transform_0, window_bounds = array<i64: 9>}, {transform_indices = @transform_1, window_bounds = array<i64: 3>}, {transform_indices = @transform_2, window_bounds = array<i64: 4>}, {transform_indices = @transform_3, window_bounds = array<i64: 88, 256>}, {transform_indices = @transform_4, window_bounds = array<i64: 88, 256>}]} {
    %c0 = arith.constant 0 : index
    %c0_0 = arith.constant 0 : index
    %0 = vector.load %arg4[%c0, %c0_0] : memref<88x256xf32, #tpu.memory_space<vmem>>, vector<8x256xf32>
    %c8 = arith.constant 8 : index
    %c0_1 = arith.constant 0 : index
    %1 = vector.load %arg4[%c8, %c0_1] : memref<88x256xf32, #tpu.memory_space<vmem>>, vector<8x256xf32>
    %c16 = arith.constant 16 : index
    %c0_2 = arith.constant 0 : index
    %2 = vector.load %arg4[%c16, %c0_2] : memref<88x256xf32, #tpu.memory_space<vmem>>, vector<8x256xf32>
    %c0_3 = arith.constant 0 : index
    %3 = memref.load %arg1[%c0_3] : memref<9xf32, #tpu.memory_space<smem>>
    %4 = vector.broadcast %3 : f32 to vector<8x256xf32>
    %5 = arith.mulf %4, %0 : vector<8x256xf32>
    %c1 = arith.constant 1 : index
    %6 = memref.load %arg1[%c1] : memref<9xf32, #tpu.memory_space<smem>>
    %7 = vector.broadcast %6 : f32 to vector<8x256xf32>
    %8 = arith.mulf %7, %1 : vector<8x256xf32>
    %9 = arith.addf %5, %8 : vector<8x256xf32>
    %c2 = arith.constant 2 : index
    %10 = memref.load %arg1[%c2] : memref<9xf32, #tpu.memory_space<smem>>
    %11 = vector.broadcast %10 : f32 to vector<8x256xf32>
    %12 = arith.mulf %11, %2 : vector<8x256xf32>
    %13 = arith.addf %9, %12 : vector<8x256xf32>
    %c0_4 = arith.constant 0 : index
    %14 = memref.load %arg2[%c0_4] : memref<3xf32, #tpu.memory_space<smem>>
    %15 = vector.broadcast %14 : f32 to vector<8x256xf32>
    %16 = arith.addf %13, %15 : vector<8x256xf32>
    %c0_5 = arith.constant 0 : index
    %c0_6 = arith.constant 0 : index
    %17 = vector.load %arg5[%c0_5, %c0_6] : memref<88x256xf32, #tpu.memory_space<vmem>>, vector<8x256xf32>
    tpu.vector_store %arg5[%c0_5, %c0_6], %16 {strides = array<i32>} : memref<88x256xf32, #tpu.memory_space<vmem>>, vector<8x256xf32>,
    %c3 = arith.constant 3 : index
    %18 = memref.load %arg1[%c3] : memref<9xf32, #tpu.memory_space<smem>>
    %19 = vector.broadcast %18 : f32 to vector<8x256xf32>
    %20 = arith.mulf %19, %0 : vector<8x256xf32>
    %c4 = arith.constant 4 : index
    %21 = memref.load %arg1[%c4] : memref<9xf32, #tpu.memory_space<smem>>
    %22 = vector.broadcast %21 : f32 to vector<8x256xf32>
    %23 = arith.mulf %22, %1 : vector<8x256xf32>
    %24 = arith.addf %20, %23 : vector<8x256xf32>
    %c5 = arith.constant 5 : index
    %25 = memref.load %arg1[%c5] : memref<9xf32, #tpu.memory_space<smem>>
    %26 = vector.broadcast %25 : f32 to vector<8x256xf32>
    %27 = arith.mulf %26, %2 : vector<8x256xf32>
    %28 = arith.addf %24, %27 : vector<8x256xf32>
    %c1_7 = arith.constant 1 : index
    %29 = memref.load %arg2[%c1_7] : memref<3xf32, #tpu.memory_space<smem>>
    %30 = vector.broadcast %29 : f32 to vector<8x256xf32>
    %31 = arith.addf %28, %30 : vector<8x256xf32>
    %c8_8 = arith.constant 8 : index
    %c0_9 = arith.constant 0 : index
    %32 = vector.load %arg5[%c8_8, %c0_9] : memref<88x256xf32, #tpu.memory_space<vmem>>, vector<8x256xf32>
    tpu.vector_store %arg5[%c8_8, %c0_9], %31 {strides = array<i32>} : memref<88x256xf32, #tpu.memory_space<vmem>>, vector<8x256xf32>,
    %c6 = arith.constant 6 : index
    %33 = memref.load %arg1[%c6] : memref<9xf32, #tpu.memory_space<smem>>
    %34 = vector.broadcast %33 : f32 to vector<8x256xf32>
    %35 = arith.mulf %34, %0 : vector<8x256xf32>
    %c7 = arith.constant 7 : index
    %36 = memref.load %arg1[%c7] : memref<9xf32, #tpu.memory_space<smem>>
    %37 = vector.broadcast %36 : f32 to vector<8x256xf32>
    %38 = arith.mulf %37, %1 : vector<8x256xf32>
    %39 = arith.addf %35, %38 : vector<8x256xf32>
    %c8_10 = arith.constant 8 : index
    %40 = memref.load %arg1[%c8_10] : memref<9xf32, #tpu.memory_space<smem>>
    %41 = vector.broadcast %40 : f32 to vector<8x256xf32>
    %42 = arith.mulf %41, %2 : vector<8x256xf32>
    %43 = arith.addf %39, %42 : vector<8x256xf32>
    %c2_11 = arith.constant 2 : index
    %44 = memref.load %arg2[%c2_11] : memref<3xf32, #tpu.memory_space<smem>>
    %45 = vector.broadcast %44 : f32 to vector<8x256xf32>
    %46 = arith.addf %43, %45 : vector<8x256xf32>
    %c16_12 = arith.constant 16 : index
    %c0_13 = arith.constant 0 : index
    %47 = vector.load %arg5[%c16_12, %c0_13] : memref<88x256xf32, #tpu.memory_space<vmem>>, vector<8x256xf32>
    tpu.vector_store %arg5[%c16_12, %c0_13], %46 {strides = array<i32>} : memref<88x256xf32, #tpu.memory_space<vmem>>, vector<8x256xf32>,
    %c24 = arith.constant 24 : index
    %c0_14 = arith.constant 0 : index
    %48 = vector.load %arg4[%c24, %c0_14] : memref<88x256xf32, #tpu.memory_space<vmem>>, vector<8x256xf32>
    %c32 = arith.constant 32 : index
    %c0_15 = arith.constant 0 : index
    %49 = vector.load %arg4[%c32, %c0_15] : memref<88x256xf32, #tpu.memory_space<vmem>>, vector<8x256xf32>
    %c40 = arith.constant 40 : index
    %c0_16 = arith.constant 0 : index
    %50 = vector.load %arg4[%c40, %c0_16] : memref<88x256xf32, #tpu.memory_space<vmem>>, vector<8x256xf32>
    %c48 = arith.constant 48 : index
    %c0_17 = arith.constant 0 : index
    %51 = vector.load %arg4[%c48, %c0_17] : memref<88x256xf32, #tpu.memory_space<vmem>>, vector<8x256xf32>
    %52 = arith.mulf %48, %48 : vector<8x256xf32>
    %53 = arith.mulf %49, %49 : vector<8x256xf32>
    %54 = arith.addf %52, %53 : vector<8x256xf32>
    %55 = arith.mulf %50, %50 : vector<8x256xf32>
    %56 = arith.addf %54, %55 : vector<8x256xf32>
    %57 = arith.mulf %51, %51 : vector<8x256xf32>
    %58 = arith.addf %56, %57 : vector<8x256xf32>
    %cst = arith.constant 9.99999996E-13 : f32
    %59 = vector.broadcast %cst : f32 to vector<8x256xf32>
    %60 = arith.addf %58, %59 : vector<8x256xf32>
    %61 = math.rsqrt %60 : vector<8x256xf32>
    %62 = arith.mulf %48, %61 : vector<8x256xf32>
    %63 = arith.mulf %49, %61 : vector<8x256xf32>
    %64 = arith.mulf %50, %61 : vector<8x256xf32>
    %65 = arith.mulf %51, %61 : vector<8x256xf32>
    %c0_18 = arith.constant 0 : index
    %66 = memref.load %arg3[%c0_18] : memref<4xf32, #tpu.memory_space<smem>>
    %c1_19 = arith.constant 1 : index
    %67 = memref.load %arg3[%c1_19] : memref<4xf32, #tpu.memory_space<smem>>
    %c2_20 = arith.constant 2 : index
    %68 = memref.load %arg3[%c2_20] : memref<4xf32, #tpu.memory_space<smem>>
    %c3_21 = arith.constant 3 : index
    %69 = memref.load %arg3[%c3_21] : memref<4xf32, #tpu.memory_space<smem>>
    %70 = vector.broadcast %66 : f32 to vector<8x256xf32>
    %71 = arith.mulf %70, %62 : vector<8x256xf32>
    %72 = vector.broadcast %67 : f32 to vector<8x256xf32>
    %73 = arith.mulf %72, %63 : vector<8x256xf32>
    %74 = arith.subf %71, %73 : vector<8x256xf32>
    %75 = vector.broadcast %68 : f32 to vector<8x256xf32>
    %76 = arith.mulf %75, %64 : vector<8x256xf32>
    %77 = arith.subf %74, %76 : vector<8x256xf32>
    %78 = vector.broadcast %69 : f32 to vector<8x256xf32>
    %79 = arith.mulf %78, %65 : vector<8x256xf32>
    %80 = arith.subf %77, %79 : vector<8x256xf32>
    %c24_22 = arith.constant 24 : index
    %c0_23 = arith.constant 0 : index
    %81 = vector.load %arg5[%c24_22, %c0_23] : memref<88x256xf32, #tpu.memory_space<vmem>>, vector<8x256xf32>
    tpu.vector_store %arg5[%c24_22, %c0_23], %80 {strides = array<i32>} : memref<88x256xf32, #tpu.memory_space<vmem>>, vector<8x256xf32>,
    %82 = vector.broadcast %66 : f32 to vector<8x256xf32>
    %83 = arith.mulf %82, %63 : vector<8x256xf32>
    %84 = vector.broadcast %67 : f32 to vector<8x256xf32>
    %85 = arith.mulf %84, %62 : vector<8x256xf32>
    %86 = arith.addf %83, %85 : vector<8x256xf32>
    %87 = vector.broadcast %68 : f32 to vector<8x256xf32>
    %88 = arith.mulf %87, %65 : vector<8x256xf32>
    %89 = arith.addf %86, %88 : vector<8x256xf32>
    %90 = vector.broadcast %69 : f32 to vector<8x256xf32>
    %91 = arith.mulf %90, %64 : vector<8x256xf32>
    %92 = arith.subf %89, %91 : vector<8x256xf32>
    %c32_24 = arith.constant 32 : index
    %c0_25 = arith.constant 0 : index
    %93 = vector.load %arg5[%c32_24, %c0_25] : memref<88x256xf32, #tpu.memory_space<vmem>>, vector<8x256xf32>
    tpu.vector_store %arg5[%c32_24, %c0_25], %92 {strides = array<i32>} : memref<88x256xf32, #tpu.memory_space<vmem>>, vector<8x256xf32>,
    %94 = vector.broadcast %66 : f32 to vector<8x256xf32>
    %95 = arith.mulf %94, %64 : vector<8x256xf32>
    %96 = vector.broadcast %67 : f32 to vector<8x256xf32>
    %97 = arith.mulf %96, %65 : vector<8x256xf32>
    %98 = arith.subf %95, %97 : vector<8x256xf32>
    %99 = vector.broadcast %68 : f32 to vector<8x256xf32>
    %100 = arith.mulf %99, %62 : vector<8x256xf32>
    %101 = arith.addf %98, %100 : vector<8x256xf32>
    %102 = vector.broadcast %69 : f32 to vector<8x256xf32>
    %103 = arith.mulf %102, %63 : vector<8x256xf32>
    %104 = arith.addf %101, %103 : vector<8x256xf32>
    %c40_26 = arith.constant 40 : index
    %c0_27 = arith.constant 0 : index
    %105 = vector.load %arg5[%c40_26, %c0_27] : memref<88x256xf32, #tpu.memory_space<vmem>>, vector<8x256xf32>
    tpu.vector_store %arg5[%c40_26, %c0_27], %104 {strides = array<i32>} : memref<88x256xf32, #tpu.memory_space<vmem>>, vector<8x256xf32>,
    %106 = vector.broadcast %66 : f32 to vector<8x256xf32>
    %107 = arith.mulf %106, %65 : vector<8x256xf32>
    %108 = vector.broadcast %67 : f32 to vector<8x256xf32>
    %109 = arith.mulf %108, %64 : vector<8x256xf32>
    %110 = arith.addf %107, %109 : vector<8x256xf32>
    %111 = vector.broadcast %68 : f32 to vector<8x256xf32>
    %112 = arith.mulf %111, %63 : vector<8x256xf32>
    %113 = arith.subf %110, %112 : vector<8x256xf32>
    %114 = vector.broadcast %69 : f32 to vector<8x256xf32>
    %115 = arith.mulf %114, %62 : vector<8x256xf32>
    %116 = arith.addf %113, %115 : vector<8x256xf32>
    %c48_28 = arith.constant 48 : index
    %c0_29 = arith.constant 0 : index
    %117 = vector.load %arg5[%c48_28, %c0_29] : memref<88x256xf32, #tpu.memory_space<vmem>>, vector<8x256xf32>
    tpu.vector_store %arg5[%c48_28, %c0_29], %116 {strides = array<i32>} : memref<88x256xf32, #tpu.memory_space<vmem>>, vector<8x256xf32>,
    %c56 = arith.constant 56 : index
    %c0_30 = arith.constant 0 : index
    %118 = vector.load %arg4[%c56, %c0_30] : memref<88x256xf32, #tpu.memory_space<vmem>>, vector<24x256xf32>
    %119 = math.exp %118 : vector<24x256xf32>
    %c56_31 = arith.constant 56 : index
    %c0_32 = arith.constant 0 : index
    %120 = vector.load %arg5[%c56_31, %c0_32] : memref<88x256xf32, #tpu.memory_space<vmem>>, vector<24x256xf32>
    tpu.vector_store %arg5[%c56_31, %c0_32], %119 {strides = array<i32>} : memref<88x256xf32, #tpu.memory_space<vmem>>, vector<24x256xf32>,
    %c80 = arith.constant 80 : index
    %c0_33 = arith.constant 0 : index
    %121 = vector.load %arg4[%c80, %c0_33] : memref<88x256xf32, #tpu.memory_space<vmem>>, vector<8x256xf32>
    %122 = arith.negf %121 : vector<8x256xf32>
    %123 = math.exp %122 : vector<8x256xf32>
    %cst_34 = arith.constant 1.000000e+00 : f32
    %124 = vector.broadcast %cst_34 : f32 to vector<8x256xf32>
    %125 = arith.addf %124, %123 : vector<8x256xf32>
    %126 = arith.divf %124, %125 : vector<8x256xf32>
    %c80_35 = arith.constant 80 : index
    %c0_36 = arith.constant 0 : index
    %127 = vector.load %arg5[%c80_35, %c0_36] : memref<88x256xf32, #tpu.memory_space<vmem>>, vector<8x256xf32>
    tpu.vector_store %arg5[%c80_35, %c0_36], %126 {strides = array<i32>} : memref<88x256xf32, #tpu.memory_space<vmem>>, vector<8x256xf32>,
    return
  }
  func.func @transform_0(%arg0: i32) -> i32 {
    %c0_i32 = arith.constant 0 : i32
    %c0_i32_0 = arith.constant 0 : i32
    return %c0_i32 : i32
  }
  func.func @transform_1(%arg0: i32) -> i32 {
    %c0_i32 = arith.constant 0 : i32
    %c0_i32_0 = arith.constant 0 : i32
    return %c0_i32 : i32
  }
  func.func @transform_2(%arg0: i32) -> i32 {
    %c0_i32 = arith.constant 0 : i32
    %c0_i32_0 = arith.constant 0 : i32
    return %c0_i32 : i32
  }
  func.func @transform_3(%arg0: i32) -> (i32, i32) {
    %c0_i32 = arith.constant 0 : i32
    %c0_i32_0 = arith.constant 0 : i32
    return %c0_i32, %arg0 : i32, i32
  }
  func.func @transform_4(%arg0: i32) -> (i32, i32) {
    %c0_i32 = arith.constant 0 : i32
    %c0_i32_0 = arith.constant 0 : i32
    return %c0_i32, %arg0 : i32, i32
  }
}

</mosaic_0001>

<llo_original>
// kernel: tpu_custom_call.1
$region0: #{tpu_custom_call.1}
  #allocation0 [shape = 'u32[]', space=smem, size = 0x4, offset = 0x4, fixed_abs, tag = 'smem constant byte address 0x4 - core index']
  #allocation1 [shape = 'u32[144,128]{1,0:T(1,128)}', space=vmem, size = 0x12000, scoped, tag = 'internal scratch']
  %s0 = inlined_call_operand.hbm [shape: f32[9], index: 0, kind: input, shape index: {}]
  %s1 = inlined_call_operand.vmem [shape: f32[3], index: 1, kind: input, shape index: {}]
  %s2 = inlined_call_operand.vmem [shape: f32[4], index: 2, kind: input, shape index: {}]
  %s3 = inlined_call_operand.hbm [shape: f32[88,512], index: 3, kind: input, shape index: {}]
  %s4 = inlined_call_operand.hbm [shape: f32[88,512], index: 4, kind: output, shape index: {}]
  %s5 = sld [smem:[#allocation0]]
  $region65: #{tpu_custom_call.1} parent=0
    _
  %s7 = ssub.s32 1, %s5
  %s8 = scalar_select 0, %s7, %s5
  $region1: #{tpu_custom_call.1} parent=0
    #allocation2 [shape = 'u8[512]{0}', space=smem, size = 0x200, scoped, tag = 'input window, operand 0, single buffered']
    #allocation3 [shape = 's32[2]{0}', space=sflag, size = 0x8, scoped, tag = 'scoped memory for tpu_custom_call.1']
    #allocation4 [shape = 's32[2]{0}', space=sflag, size = 0x8, scoped, tag = 'scoped memory for tpu_custom_call.1']
    #allocation5 [shape = 's32[2]{0}', space=sflag, size = 0x8, scoped, tag = 'scoped memory for tpu_custom_call.1']
    #allocation6 [shape = 's32[2]{0}', space=sflag, size = 0x8, scoped, tag = 'scoped memory for tpu_custom_call.1']
    #allocation7 [shape = 'u8[512]{0}', space=smem, size = 0x200, scoped, tag = 'input window, operand 1, single buffered']
    #allocation8 [shape = 'u8[512]{0}', space=smem, size = 0x200, scoped, tag = 'input window, operand 2, single buffered']
    #allocation9 [shape = 's32[1]{0}', space=sflag, size = 0x4, scoped, tag = 'scoped memory for tpu_custom_call.1']
    #allocation10 [shape = 'u8[180224]{0}', space=vmem, size = 0x2c000, scoped, tag = 'input window, operand 3']
    #allocation11 [shape = 'u8[180224]{0}', space=vmem, size = 0x2c000, scoped, tag = 'output window, operand 0']
    %9 = vsyncpa [#allocation5], 0
    %10 = vsyncpa [#allocation6], 0
    %11 = vsyncpa [#allocation9], 0
    %12 = vsyncpa [#allocation3], 0
    %s13 = scalar_lea.sflag [#allocation3], 1
    %14 = vsyncpa %s13, 0
    %15 = vsyncpa [#allocation4], 0
    %s16 = scalar_lea.sflag [#allocation4], 1
    %17 = vsyncpa %s16, 0
    loop: start=0, step=1, limit=4
    $region2: #{tpu_custom_call.1} parent=1 // loop_pre_header
      _
    $region3: #{tpu_custom_call.1} parent=1 // loop_header
      %s19 = sphi 0, %s23
      %p20 = scmp.ge.s32.totalorder %s19, 4
      %s27 = sphi 0, %s27
      %s29 = sphi 0, %s27
      %s30 = sphi 0, %s29
      %s44 = sphi 0, %s30
      %s48 = sphi 0, %s48
      %s50 = sphi 0, %s48
      %s51 = sphi 0, %s50
      %s65 = sphi 0, %s51
      %s69 = sphi 0, %s69
      %s71 = sphi 0, %s69
      %s72 = sphi 0, %s71
      %s86 = sphi 0, %s72
      %s92 = sphi 0, %s94
      %s95 = sphi 0, %s92
      %s96 = sphi 0, %s95
      %s112 = sphi 0, %s96
      %s118 = sphi 0, %s120
      %s121 = sphi 0, %s118
      %s122 = sphi 0, %s121
      %s138 = sphi 0, %s122
    $region4: #{tpu_custom_call.1} parent=1 // loop_header_branch
      %22 = sbr.rel (%p20) target = $region8
    $region5: #{tpu_custom_call.1} parent=1 // loop_body
      %s24 = ssub.s32 %s19, 1
      %s25 = ssub.s32 %s19, 2
      %s26 = sadd.s32 %s19, 1
      %s28 = sadd.s32 %s27, 1
      %p31 = scmp.eq.s32.totalorder %s19, 1
      %p32 = scmp.ne.s32.totalorder %s27, %s29
      %p33 = scmp.eq.s32.totalorder %s19, 0
      %p34 = por %p32, %p33
      %p35 = scmp.ne.s32.totalorder %s27, %s29
      %p36 = scmp.eq.s32.totalorder %s24, 1
      %p37 = por %p35, %p36
      %p38 = scmp.ne.s32.totalorder %s29, %s30
      %p39 = scmp.eq.s32.totalorder %s24, 0
      %p40 = por %p38, %p39
      %p41 = scmp.ne.s32.totalorder %s29, %s30
      %p42 = scmp.eq.s32.totalorder %s25, 1
      %p43 = por %p41, %p42
      %p45 = scmp.ne.s32.totalorder %s30, %s44
      %p46 = scmp.eq.s32.totalorder %s25, 0
      %p47 = por %p45, %p46
      %s49 = sadd.s32 %s48, 1
      %p52 = scmp.eq.s32.totalorder %s19, 1
      %p53 = scmp.ne.s32.totalorder %s48, %s50
      %p54 = scmp.eq.s32.totalorder %s19, 0
      %p55 = por %p53, %p54
      %p56 = scmp.ne.s32.totalorder %s48, %s50
      %p57 = scmp.eq.s32.totalorder %s24, 1
      %p58 = por %p56, %p57
      %p59 = scmp.ne.s32.totalorder %s50, %s51
      %p60 = scmp.eq.s32.totalorder %s24, 0
      %p61 = por %p59, %p60
      %p62 = scmp.ne.s32.totalorder %s50, %s51
      %p63 = scmp.eq.s32.totalorder %s25, 1
      %p64 = por %p62, %p63
      %p66 = scmp.ne.s32.totalorder %s51, %s65
      %p67 = scmp.eq.s32.totalorder %s25, 0
      %p68 = por %p66, %p67
      %s70 = sadd.s32 %s69, 1
      %p73 = scmp.eq.s32.totalorder %s19, 1
      %p74 = scmp.ne.s32.totalorder %s69, %s71
      %p75 = scmp.eq.s32.totalorder %s19, 0
      %p76 = por %p74, %p75
      %p77 = scmp.ne.s32.totalorder %s69, %s71
      %p78 = scmp.eq.s32.totalorder %s24, 1
      %p79 = por %p77, %p78
      %p80 = scmp.ne.s32.totalorder %s71, %s72
      %p81 = scmp.eq.s32.totalorder %s24, 0
      %p82 = por %p80, %p81
      %p83 = scmp.ne.s32.totalorder %s71, %s72
      %p84 = scmp.eq.s32.totalorder %s25, 1
      %p85 = por %p83, %p84
      %p87 = scmp.ne.s32.totalorder %s72, %s86
      %p88 = scmp.eq.s32.totalorder %s25, 0
      %p89 = por %p87, %p88
      %s90 = ssub.s32 %s19, %s26
      %p91 = scmp.eq.s32.totalorder %s90, 0
      %s93 = sadd.s32 %s92, 1
      %s94 = scalar_select %p91, %s92, %s93
      %p97 = pneg %p91
      %p98 = scmp.eq.s32.totalorder %s19, 1
      %p99 = por %p97, %p98
      %p100 = scmp.ne.s32.totalorder %s92, %s95
      %p101 = scmp.eq.s32.totalorder %s19, 0
      %p102 = por %p100, %p101
      %p103 = scmp.ne.s32.totalorder %s92, %s95
      %p104 = scmp.eq.s32.totalorder %s24, 1
      %p105 = por %p103, %p104
      %p106 = scmp.ne.s32.totalorder %s95, %s96
      %p107 = scmp.eq.s32.totalorder %s24, 0
      %p108 = por %p106, %p107
      %p109 = scmp.ne.s32.totalorder %s95, %s96
      %p110 = scmp.eq.s32.totalorder %s25, 1
      %p111 = por %p109, %p110
      %p113 = scmp.ne.s32.totalorder %s96, %s112
      %p114 = scmp.eq.s32.totalorder %s25, 0
      %p115 = por %p113, %p114
      %s116 = ssub.s32 %s19, %s26
      %p117 = scmp.eq.s32.totalorder %s116, 0
      %s119 = sadd.s32 %s118, 1
      %s120 = scalar_select %p117, %s118, %s119
      %p123 = pneg %p117
      %p124 = scmp.eq.s32.totalorder %s19, 1
      %p125 = por %p123, %p124
      %p126 = scmp.ne.s32.totalorder %s118, %s121
      %p127 = scmp.eq.s32.totalorder %s19, 0
      %p128 = por %p126, %p127
      %p129 = scmp.ne.s32.totalorder %s118, %s121
      %p130 = scmp.eq.s32.totalorder %s24, 1
      %p131 = por %p129, %p130
      %p132 = scmp.ne.s32.totalorder %s121, %s122
      %p133 = scmp.eq.s32.totalorder %s24, 0
      %p134 = por %p132, %p133
      %p135 = scmp.ne.s32.totalorder %s121, %s122
      %p136 = scmp.eq.s32.totalorder %s25, 1
      %p137 = por %p135, %p136
      %p139 = scmp.ne.s32.totalorder %s122, %s138
      %p140 = scmp.eq.s32.totalorder %s25, 0
      %p141 = por %p139, %p140
      %p142 = scmp.le.s32.totalorder 1, %s19
      %p143 = scmp.lt.s32.totalorder %s19, 3
      %p144 = pnand %p142, %p143
      %p145 = pneg %p144
      // Predicated region
      $region9: #{tpu_custom_call.1} parent=5 // pred_check
        _
      $region10: #{tpu_custom_call.1} parent=5 // pred_check_branch
        %147 = sbr.rel (%p144) target = $region12
      $region11: #{tpu_custom_call.1} parent=5 // pred_region
        %s148 = ssub.s32 %s19, 1
        // Predicated region
        $region13: #{tpu_custom_call.1} parent=11 // pred_check
          %p149 = pneg %p40
        $region14: #{tpu_custom_call.1} parent=11 // pred_check_branch
          %151 = sbr.rel (%p149) target = $region16
        $region15: #{tpu_custom_call.1} parent=11 // pred_region
          %s153 = ssub.s32 16, 16
          %154 = vsyncadd [#allocation5], %s153
          %157 = dma.hbm_to_smem %s0, 16, [#allocation2], [#allocation5]
        $region16: #{tpu_custom_call.1} parent=11 // pred_fallthru
          _
        // Predicated region
        $region17: #{tpu_custom_call.1} parent=11 // pred_check
          %p158 = pneg %p61
        $region18: #{tpu_custom_call.1} parent=11 // pred_check_branch
          %160 = sbr.rel (%p158) target = $region20
        $region19: #{tpu_custom_call.1} parent=11 // pred_region
          %s162 = ssub.s32 16, 16
          %163 = vsyncadd [#allocation6], %s162
          %s165 = sshll.u32 %s1, 4
          %s166 = int_to_ptr.vmem [resolvable:$true] %s165
          %168 = dma.vmem_to_smem %s166, 16, [#allocation7], [#allocation6]
        $region20: #{tpu_custom_call.1} parent=11 // pred_fallthru
          _
        // Predicated region
        $region21: #{tpu_custom_call.1} parent=11 // pred_check
          %p169 = pneg %p82
        $region22: #{tpu_custom_call.1} parent=11 // pred_check_branch
          %171 = sbr.rel (%p169) target = $region24
        $region23: #{tpu_custom_call.1} parent=11 // pred_region
          %s173 = ssub.s32 16, 16
          %174 = vsyncadd [#allocation9], %s173
          %s176 = sshll.u32 %s2, 4
          %s177 = int_to_ptr.vmem [resolvable:$true] %s176
          %179 = dma.vmem_to_smem %s177, 16, [#allocation8], [#allocation9]
        $region24: #{tpu_custom_call.1} parent=11 // pred_fallthru
          _
      $region12: #{tpu_custom_call.1} parent=5 // pred_fallthru
        _
      %p180 = scmp.lt.s32.totalorder %s19, 2
      // Predicated region
      $region25: #{tpu_custom_call.1} parent=5 // pred_check
        %p181 = pneg %p180
      $region26: #{tpu_custom_call.1} parent=5 // pred_check_branch
        %183 = sbr.rel (%p181) target = $region28
      $region27: #{tpu_custom_call.1} parent=5 // pred_region
        // Predicated region
        $region29: #{tpu_custom_call.1} parent=27 // pred_check
          %p184 = pneg %p102
        $region30: #{tpu_custom_call.1} parent=27 // pred_check_branch
          %186 = sbr.rel (%p184) target = $region32
        $region31: #{tpu_custom_call.1} parent=27 // pred_region
          %s187 = sand.u32 %s92, 1
          %s188 = scalar_lea.sflag [#allocation3], %s187
          %s189 = sand.u32 %s92, 1
          %s190 = smul.addr %s189, 176
          %s191 = scalar_lea.vmem [#allocation10], %s190
          %s192 = smul.u32 2, %s19
          %s194 = ssub.s32 2816, 2816
          %195 = vsyncadd %s188, %s194
          %s196 = smul.addr %s192, 128
          %s197 = scalar_lea.hbm %s3, %s196
          %s198 = sshll.u32 %s191, 4
          %s199 = int_to_ptr.vmem [resolvable:$true] %s198
          %204 = dma.hbm_to_vmem [thread:$0]  %s197, 2816, %s199, %s188, 512, 256, 16
        $region32: #{tpu_custom_call.1} parent=27 // pred_fallthru
          _
      $region28: #{tpu_custom_call.1} parent=5 // pred_fallthru
        _
      %p205 = scmp.le.s32.totalorder 1, %s19
      %p206 = scmp.lt.s32.totalorder %s19, 3
      %p207 = pnand %p205, %p206
      %p208 = pneg %p207
      // Predicated region
      $region33: #{tpu_custom_call.1} parent=5 // pred_check
        _
      $region34: #{tpu_custom_call.1} parent=5 // pred_check_branch
        %210 = sbr.rel (%p207) target = $region36
      $region35: #{tpu_custom_call.1} parent=5 // pred_region
        %s211 = ssub.s32 %s19, 1
        // Predicated region
        $region37: #{tpu_custom_call.1} parent=35 // pred_check
          %p212 = pneg %p40
        $region38: #{tpu_custom_call.1} parent=35 // pred_check_branch
          %214 = sbr.rel (%p212) target = $region40
        $region39: #{tpu_custom_call.1} parent=35 // pred_region
          %215 = dma.done [#allocation5], 16
        $region40: #{tpu_custom_call.1} parent=35 // pred_fallthru
          _
        // Predicated region
        $region41: #{tpu_custom_call.1} parent=35 // pred_check
          %p216 = pneg %p61
        $region42: #{tpu_custom_call.1} parent=35 // pred_check_branch
          %218 = sbr.rel (%p216) target = $region44
        $region43: #{tpu_custom_call.1} parent=35 // pred_region
          %219 = dma.done [#allocation6], 16
        $region44: #{tpu_custom_call.1} parent=35 // pred_fallthru
          _
        // Predicated region
        $region45: #{tpu_custom_call.1} parent=35 // pred_check
          %p220 = pneg %p82
        $region46: #{tpu_custom_call.1} parent=35 // pred_check_branch
          %222 = sbr.rel (%p220) target = $region48
        $region47: #{tpu_custom_call.1} parent=35 // pred_region
          %223 = dma.done [#allocation9], 16
        $region48: #{tpu_custom_call.1} parent=35 // pred_fallthru
          _
        %s224 = sand.u32 %s95, 1
        %s225 = scalar_lea.sflag [#allocation3], %s224
        %s226 = sand.u32 %s95, 1
        %s227 = smul.addr %s226, 176
        %s228 = scalar_lea.vmem [#allocation10], %s227
        // Predicated region
        $region49: #{tpu_custom_call.1} parent=35 // pred_check
          %p229 = pneg %p108
        $region50: #{tpu_custom_call.1} parent=35 // pred_check_branch
          %231 = sbr.rel (%p229) target = $region52
        $region51: #{tpu_custom_call.1} parent=35 // pred_region
          %232 = dma.done %s225, 2816
        $region52: #{tpu_custom_call.1} parent=35 // pred_fallthru
          _
        %233 = sfence
        %p234 = pneg %p40
        %p235 = pneg %p37
        %p236 = pneg %p61
        %p237 = pneg %p58
        %p238 = pneg %p82
        %p239 = pneg %p79
        %s240 = sand.u32 %s95, 1
        %s241 = scalar_lea.sflag [#allocation3], %s240
        %s242 = sand.u32 %s95, 1
        %s243 = smul.addr %s242, 176
        %s244 = scalar_lea.vmem [#allocation10], %s243
        %p245 = pneg %p108
        %p246 = pneg %p105
        %p247 = pneg %p134
        %p248 = pneg %p131
        %s249 = sand.u32 %s121, 1
        %s250 = scalar_lea.sflag [#allocation4], %s249
        %s251 = sand.u32 %s121, 1
        %s252 = smul.addr %s251, 176
        %s253 = scalar_lea.vmem [#allocation11], %s252
        %s254 = smul.u32 2, %s24
        %s255 = smul.u32 2, %s24
        %v256 = vld [vmem:[%s228] sm:$0xff]
        %v257 = vld [vmem:[%s228 + $0x8] sm:$0xff]
        %v258 = vld [vmem:[%s228 + $0x10] sm:$0xff]
        %v259 = vld [vmem:[%s228 + $0x18] sm:$0xff]
        %v260 = vld [vmem:[%s228 + $0x20] sm:$0xff]
        %v261 = vld [vmem:[%s228 + $0x28] sm:$0xff]
        %s262 = sld [smem:[#allocation2]]
        %v263 = vstv %s262
        %v264 = vmul.f32 %v263, %v256
        %v265 = vmul.f32 %v263, %v257
        %s266 = sld [smem:[#allocation2 + $0x1]]
        %v267 = vstv %s266
        %v268 = vmul.f32 %v267, %v258
        %v269 = vmul.f32 %v267, %v259
        %v270 = vadd.f32 %v264, %v268
        %v271 = vadd.f32 %v265, %v269
        %s272 = sld [smem:[#allocation2 + $0x2]]
        %v273 = vstv %s272
        %v274 = vmul.f32 %v273, %v260
        %v275 = vmul.f32 %v273, %v261
        %v276 = vadd.f32 %v270, %v274
        %v277 = vadd.f32 %v271, %v275
        %s278 = sld [smem:[#allocation7]]
        %v279 = vstv %s278
        %v280 = vadd.f32 %v276, %v279
        %v281 = vadd.f32 %v277, %v279
        %282 = vst [vmem:[%s253] sm:$0xff] %v280
        %283 = vst [vmem:[%s253 + $0x8] sm:$0xff] %v281
        %s284 = sld [smem:[#allocation2 + $0x3]]
        %v285 = vstv %s284
        %v286 = vmul.f32 %v285, %v256
        %v287 = vmul.f32 %v285, %v257
        %s288 = sld [smem:[#allocation2 + $0x4]]
        %v289 = vstv %s288
        %v290 = vmul.f32 %v289, %v258
        %v291 = vmul.f32 %v289, %v259
        %v292 = vadd.f32 %v286, %v290
        %v293 = vadd.f32 %v287, %v291
        %s294 = sld [smem:[#allocation2 + $0x5]]
        %v295 = vstv %s294
        %v296 = vmul.f32 %v295, %v260
        %v297 = vmul.f32 %v295, %v261
        %v298 = vadd.f32 %v292, %v296
        %v299 = vadd.f32 %v293, %v297
        %s300 = sld [smem:[#allocation7 + $0x1]]
        %v301 = vstv %s300
        %v302 = vadd.f32 %v298, %v301
        %v303 = vadd.f32 %v299, %v301
        %304 = vst [vmem:[%s253 + $0x10] sm:$0xff] %v302
        %305 = vst [vmem:[%s253 + $0x18] sm:$0xff] %v303
        %s306 = sld [smem:[#allocation2 + $0x6]]
        %v307 = vstv %s306
        %v308 = vmul.f32 %v307, %v256
        %v309 = vmul.f32 %v307, %v257
        %s310 = sld [smem:[#allocation2 + $0x7]]
        %v311 = vstv %s310
        %v312 = vmul.f32 %v311, %v258
        %v313 = vmul.f32 %v311, %v259
        %v314 = vadd.f32 %v308, %v312
        %v315 = vadd.f32 %v309, %v313
        %s316 = sld [smem:[#allocation2 + $0x8]]
        %v317 = vstv %s316
        %v318 = vmul.f32 %v317, %v260
        %v319 = vmul.f32 %v317, %v261
        %v320 = vadd.f32 %v314, %v318
        %v321 = vadd.f32 %v315, %v319
        %s322 = sld [smem:[#allocation7 + $0x2]]
        %v323 = vstv %s322
        %v324 = vadd.f32 %v320, %v323
        %v325 = vadd.f32 %v321, %v323
        %326 = vst [vmem:[%s253 + $0x20] sm:$0xff] %v324
        %327 = vst [vmem:[%s253 + $0x28] sm:$0xff] %v325
        %v328 = vld [vmem:[%s228 + $0x30] sm:$0xff]
        %v329 = vld [vmem:[%s228 + $0x38] sm:$0xff]
        %v330 = vld [vmem:[%s228 + $0x40] sm:$0xff]
        %v331 = vld [vmem:[%s228 + $0x48] sm:$0xff]
        %v332 = vld [vmem:[%s228 + $0x50] sm:$0xff]
        %v333 = vld [vmem:[%s228 + $0x58] sm:$0xff]
        %v334 = vld [vmem:[%s228 + $0x60] sm:$0xff]
        %v335 = vld [vmem:[%s228 + $0x68] sm:$0xff]
        %v336 = vmul.f32 %v328, %v328
        %v337 = vmul.f32 %v329, %v329
        %v338 = vmul.f32 %v330, %v330
        %v339 = vmul.f32 %v331, %v331
        %v340 = vadd.f32 %v336, %v338
        %v341 = vadd.f32 %v337, %v339
        %v342 = vmul.f32 %v332, %v332
        %v343 = vmul.f32 %v333, %v333
        %v344 = vadd.f32 %v340, %v342
        %v345 = vadd.f32 %v341, %v343
        %v346 = vmul.f32 %v334, %v334
        %v347 = vmul.f32 %v335, %v335
        %v348 = vadd.f32 %v344, %v346
        %v349 = vadd.f32 %v345, %v347
        %v350 = vadd.f32 %v348, 1e-12
        %v351 = vadd.f32 %v349, 1e-12
        %v352 = vrsqrt.pop %v350
        %v353 = vrsqrt.pop %v351
        %v354 = vmul.f32 %v328, %v352
        %v355 = vmul.f32 %v329, %v353
        %v356 = vmul.f32 %v330, %v352
        %v357 = vmul.f32 %v331, %v353
        %v358 = vmul.f32 %v332, %v352
        %v359 = vmul.f32 %v333, %v353
        %v360 = vmul.f32 %v334, %v352
        %v361 = vmul.f32 %v335, %v353
        %s362 = sld [smem:[#allocation8]]
        %s363 = sld [smem:[#allocation8 + $0x1]]
        %s364 = sld [smem:[#allocation8 + $0x2]]
        %s365 = sld [smem:[#allocation8 + $0x3]]
        %v366 = vstv %s362
        %v367 = vmul.f32 %v366, %v354
        %v368 = vmul.f32 %v366, %v355
        %v369 = vstv %s363
        %v370 = vmul.f32 %v369, %v356
        %v371 = vmul.f32 %v369, %v357
        %v372 = vsub.f32 %v367, %v370
        %v373 = vsub.f32 %v368, %v371
        %v374 = vstv %s364
        %v375 = vmul.f32 %v374, %v358
        %v376 = vmul.f32 %v374, %v359
        %v377 = vsub.f32 %v372, %v375
        %v378 = vsub.f32 %v373, %v376
        %v379 = vstv %s365
        %v380 = vmul.f32 %v379, %v360
        %v381 = vmul.f32 %v379, %v361
        %v382 = vsub.f32 %v377, %v380
        %v383 = vsub.f32 %v378, %v381
        %384 = vst [vmem:[%s253 + $0x30] sm:$0xff] %v382
        %385 = vst [vmem:[%s253 + $0x38] sm:$0xff] %v383
        %v386 = vmul.f32 %v366, %v356
        %v387 = vmul.f32 %v366, %v357
        %v388 = vmul.f32 %v369, %v354
        %v389 = vmul.f32 %v369, %v355
        %v390 = vadd.f32 %v386, %v388
        %v391 = vadd.f32 %v387, %v389
        %v392 = vmul.f32 %v374, %v360
        %v393 = vmul.f32 %v374, %v361
        %v394 = vadd.f32 %v390, %v392
        %v395 = vadd.f32 %v391, %v393
        %v396 = vmul.f32 %v379, %v358
        %v397 = vmul.f32 %v379, %v359
        %v398 = vsub.f32 %v394, %v396
        %v399 = vsub.f32 %v395, %v397
        %400 = vst [vmem:[%s253 + $0x40] sm:$0xff] %v398
        %401 = vst [vmem:[%s253 + $0x48] sm:$0xff] %v399
        %v402 = vmul.f32 %v366, %v358
        %v403 = vmul.f32 %v366, %v359
        %v404 = vmul.f32 %v369, %v360
        %v405 = vmul.f32 %v369, %v361
        %v406 = vsub.f32 %v402, %v404
        %v407 = vsub.f32 %v403, %v405
        %v408 = vmul.f32 %v374, %v354
        %v409 = vmul.f32 %v374, %v355
        %v410 = vadd.f32 %v406, %v408
        %v411 = vadd.f32 %v407, %v409
        %v412 = vmul.f32 %v379, %v356
        %v413 = vmul.f32 %v379, %v357
        %v414 = vadd.f32 %v410, %v412
        %v415 = vadd.f32 %v411, %v413
        %416 = vst [vmem:[%s253 + $0x50] sm:$0xff] %v414
        %417 = vst [vmem:[%s253 + $0x58] sm:$0xff] %v415
        %v418 = vmul.f32 %v366, %v360
        %v419 = vmul.f32 %v366, %v361
        %v420 = vmul.f32 %v369, %v358
        %v421 = vmul.f32 %v369, %v359
        %v422 = vadd.f32 %v418, %v420
        %v423 = vadd.f32 %v419, %v421
        %v424 = vmul.f32 %v374, %v356
        %v425 = vmul.f32 %v374, %v357
        %v426 = vsub.f32 %v422, %v424
        %v427 = vsub.f32 %v423, %v425
        %v428 = vmul.f32 %v379, %v354
        %v429 = vmul.f32 %v379, %v355
        %v430 = vadd.f32 %v426, %v428
        %v431 = vadd.f32 %v427, %v429
        %432 = vst [vmem:[%s253 + $0x60] sm:$0xff] %v430
        %433 = vst [vmem:[%s253 + $0x68] sm:$0xff] %v431
        %v434 = vld [vmem:[%s228 + $0x70] sm:$0xff]
        %v435 = vld [vmem:[%s228 + $0x78] sm:$0xff]
        %v436 = vld [vmem:[%s228 + $0x80] sm:$0xff]
        %v437 = vld [vmem:[%s228 + $0x88] sm:$0xff]
        %v438 = vld [vmem:[%s228 + $0x90] sm:$0xff]
        %v439 = vld [vmem:[%s228 + $0x98] sm:$0xff]
        %v440 = vmul.f32 %v434, 1.442695
        %v441 = vpow.pop %v440
        %v442 = vmul.f32 %v435, 1.442695
        %v443 = vpow.pop %v442
        %v444 = vmul.f32 %v436, 1.442695
        %v445 = vpow.pop %v444
        %v446 = vmul.f32 %v437, 1.442695
        %v447 = vpow.pop %v446
        %v448 = vmul.f32 %v438, 1.442695
        %v449 = vpow.pop %v448
        %v450 = vmul.f32 %v439, 1.442695
        %v451 = vpow.pop %v450
        %452 = vst [vmem:[%s253 + $0x70] sm:$0xff] %v441
        %453 = vst [vmem:[%s253 + $0x78] sm:$0xff] %v443
        %454 = vst [vmem:[%s253 + $0x80] sm:$0xff] %v445
        %455 = vst [vmem:[%s253 + $0x88] sm:$0xff] %v447
        %456 = vst [vmem:[%s253 + $0x90] sm:$0xff] %v449
        %457 = vst [vmem:[%s253 + $0x98] sm:$0xff] %v451
        %v458 = vld [vmem:[%s228 + $0xa0] sm:$0xff]
        %v459 = vld [vmem:[%s228 + $0xa8] sm:$0xff]
        %v460 = vxor.u32 %v458, 2147483648
        %v461 = vxor.u32 %v459, 2147483648
        %v462 = vmul.f32 %v460, 1.442695
        %v463 = vpow.pop %v462
        %v464 = vmul.f32 %v461, 1.442695
        %v465 = vpow.pop %v464
        %v466 = vadd.f32 %v463, 1.0
        %v467 = vadd.f32 %v465, 1.0
        %v468 = vrcp.pop %v466
        %v469 = vmul.f32 1.0, %v468
        %v470 = vrcp.pop %v467
        %v471 = vmul.f32 1.0, %v470
        %472 = vst [vmem:[%s253 + $0xa0] sm:$0xff] %v469
        %473 = vst [vmem:[%s253 + $0xa8] sm:$0xff] %v471
        %s474 = sand.u32 %s121, 1
        %s475 = scalar_lea.sflag [#allocation4], %s474
        %s476 = sand.u32 %s121, 1
        %s477 = smul.addr %s476, 176
        %s478 = scalar_lea.vmem [#allocation11], %s477
        // Predicated region
        $region53: #{tpu_custom_call.1} parent=35 // pred_check
          %p479 = pneg %p131
        $region54: #{tpu_custom_call.1} parent=35 // pred_check_branch
          %481 = sbr.rel (%p479) target = $region56
        $region55: #{tpu_custom_call.1} parent=35 // pred_region
          %s482 = smul.u32 2, %s24
          %s484 = ssub.s32 2816, 2816
          %485 = vsyncadd %s475, %s484
          %s486 = smul.addr %s482, 128
          %s487 = scalar_lea.hbm %s4, %s486
          %s488 = sshll.u32 %s478, 4
          %s489 = int_to_ptr.vmem [resolvable:$true] %s488
          %494 = dma.vmem_to_hbm [thread:$0]  %s489, 2816, %s487, %s475, 256, 512, 16
        $region56: #{tpu_custom_call.1} parent=35 // pred_fallthru
          _
      $region36: #{tpu_custom_call.1} parent=5 // pred_fallthru
        _
      %p495 = scmp.le.s32.totalorder 2, %s19
      // Predicated region
      $region57: #{tpu_custom_call.1} parent=5 // pred_check
        %p496 = pneg %p495
      $region58: #{tpu_custom_call.1} parent=5 // pred_check_branch
        %498 = sbr.rel (%p496) target = $region60
      $region59: #{tpu_custom_call.1} parent=5 // pred_region
        %s499 = ssub.s32 %s19, 2
        // Predicated region
        $region61: #{tpu_custom_call.1} parent=59 // pred_check
          %p500 = pneg %p137
        $region62: #{tpu_custom_call.1} parent=59 // pred_check_branch
          %502 = sbr.rel (%p500) target = $region64
        $region63: #{tpu_custom_call.1} parent=59 // pred_region
          %s503 = sand.u32 %s122, 1
          %s504 = scalar_lea.sflag [#allocation4], %s503
          %s505 = sand.u32 %s122, 1
          %s506 = smul.addr %s505, 176
          %s507 = scalar_lea.vmem [#allocation11], %s506
          %508 = dma.done %s504, 2816
        $region64: #{tpu_custom_call.1} parent=59 // pred_fallthru
          _
      $region60: #{tpu_custom_call.1} parent=5 // pred_fallthru
        _
    $region6: #{tpu_custom_call.1} parent=1 // loop_footer
      %s23 = sadd.s32 1, %s19
    $region7: #{tpu_custom_call.1} parent=1 // loop_footer_branch
      %18 = sbr.rel target = $region3
    $region8: #{tpu_custom_call.1} parent=1 // loop_exit
      _
    %509 = vsyncpa [#allocation3], 1
    %s510 = scalar_lea.sflag [#allocation3], 1
    %511 = vsyncpa %s510, 1
    %512 = vsyncpa [#allocation4], 1
    %s513 = scalar_lea.sflag [#allocation4], 1
    %514 = vsyncpa %s513, 1
    %515 = vsyncpa [#allocation5], 1
    %s516 = scalar_lea.sflag [#allocation5], 1
    %517 = vsyncpa %s516, 1
    %518 = vsyncpa [#allocation6], 1
    %s519 = scalar_lea.sflag [#allocation6], 1
    %520 = vsyncpa %s519, 1
    %521 = vsyncpa [#allocation9], 1

</llo_original>
